<compile_context>
chip_gen: v6e
topology: v6e:2x2x1
jax: 0.10.0
libtpu: 0.0.40
codegen_flags: <defaults>
</compile_context>

<pallas_src>
import jax
import jax.numpy as jnp
from jax.experimental import pallas as pl
from jax.experimental.pallas import tpu as pltpu


def _fused_head_kernel(x_ref, w_ref, b_ref, o_ref):
    # x_ref: (TB, H) activation dtype   w_ref: (1, H) f32   b_ref: (1, 1) f32
    # o_ref: (TB, 1) activation dtype
    # VPU multiply (promotes to f32) + XLU lane-reduce; MXU intentionally
    # unused (N=1 => MXU push cadence would bind before HBM DMA does).
    prod = x_ref[...] * w_ref[...]                       # (TB, H) f32
    acc = jnp.sum(prod, axis=-1, keepdims=True)          # (TB, 1) f32
    o_ref[...] = (acc + b_ref[...]).astype(o_ref.dtype)


def fuse_head_params(params):
    """Composes the 5 Linear layers (dropout = identity in eval) into one
    affine map.  Call once at load time.

    Valid ONLY because the head contains no nonlinearities.

    params: dict with 'w1'..'w5' in PyTorch (out, in) layout and 'b1'..'b5'.
    Returns: (w_row (1, hidden) f32, b_fused (1, 1) f32).
    """
    ws = [jnp.asarray(params[f"w{i}"], jnp.float32) for i in range(1, 6)]
    bs = [jnp.asarray(params[f"b{i}"], jnp.float32) for i in range(1, 6)]

    # W_fused = W1^T @ W2^T @ W3^T @ W4^T @ W5^T, composed right-to-left so the
    # intermediates stay (K, 1)-shaped (cheap, one-time cost).
    w_fused = ws[-1].T                                    # (16, 1)
    for w in reversed(ws[:-1]):
        w_fused = jnp.dot(w.T, w_fused, precision="highest")  # (hidden, 1)

    # b_fused = (((b1 W2^T + b2) W3^T + b3) W4^T + b4) W5^T + b5
    b_fused = bs[0]
    for w, b in zip(ws[1:], bs[1:]):
        b_fused = jnp.dot(b_fused, w.T, precision="highest") + b

    # Return the weight as a (1, hidden) row for the in-kernel VPU matvec.
    return w_fused.T.reshape(1, -1), b_fused.reshape(1, 1)


def _pick_batch_tile(B, block_b):
    """Batch tile: sublane-aligned, and >= 2 grid steps when possible so the
    'parallel' grid axis can be sharded across both v7x TensorCores."""
    if B > block_b:
        return block_b                       # block_b is a multiple of 8
    if B >= 16 and B % 8 == 0:
        half = (B // 2 + 7) // 8 * 8         # split into >= 2 aligned tiles
        return max(8, half)
    return B                                 # single full-batch tile


def aesthetic_predictor_head(image_embeds, w_row, b_fused, *, block_b=1024):
    """Runs the scoring head.

    image_embeds: (B, hidden) array (f32 or bf16).
    w_row, b_fused: output of fuse_head_params().
    Returns: (B, 1) scores in image_embeds.dtype.
    """
    B, H = image_embeds.shape
    assert w_row.shape == (1, H), (w_row.shape, H)

    tb = _pick_batch_tile(B, block_b)
    grid = (pl.cdiv(B, tb),)

    # Explicit VMEM budget: double-buffered x tile + output tiles + weights,
    # with headroom; capped well inside v7x's 64 MiB physical VMEM.
    x_bytes = jnp.dtype(image_embeds.dtype).itemsize
    needed = 2 * tb * H * x_bytes + 2 * tb * 4 + 2 * (H + 1) * 4 + (2 << 20)
    vmem_limit = int(min(max(needed, 16 << 20), 48 << 20))

    return pl.pallas_call(
        _fused_head_kernel,
        out_shape=jax.ShapeDtypeStruct((B, 1), image_embeds.dtype),
        grid_spec=pltpu.PrefetchScalarGridSpec(
            num_scalar_prefetch=0,
            grid=grid,
            in_specs=[
                # Activation tile: pipelined (double-buffered) across the grid.
                pl.BlockSpec((tb, H), lambda i: (i, 0)),
                # Fused weight row / bias: constant index -> VMEM-resident.
                pl.BlockSpec((1, H), lambda i: (0, 0)),
                pl.BlockSpec((1, 1), lambda i: (0, 0)),
            ],
            out_specs=pl.BlockSpec((tb, 1), lambda i: (i, 0)),
        ),
        compiler_params=pltpu.CompilerParams(
            # Independent batch tiles: lets Mosaic shard across both v7x TCs.
            dimension_semantics=("parallel",),
            vmem_limit_bytes=vmem_limit,
        ),
    )(image_embeds, w_row, b_fused)


def init_params(hidden_size, key):
    """Deterministic init mimicking nn.Linear default (uniform +- 1/sqrt(fan_in))."""
    dims = [(hidden_size, 1024), (1024, 128), (128, 64), (64, 16), (16, 1)]
    params = {}
    for i, (fan_in, fan_out) in enumerate(dims, start=1):
        key, kw, kb = jax.random.split(key, 3)
        bound = 1.0 / jnp.sqrt(fan_in)
        params[f"w{i}"] = jax.random.uniform(
            kw, (fan_out, fan_in), jnp.float32, -bound, bound)  # PyTorch (out, in)
        params[f"b{i}"] = jax.random.uniform(
            kb, (fan_out,), jnp.float32, -bound, bound)
    return params


def reference_forward(image_embeds, params):
    """Unfused reference: exactly the PyTorch eval-mode forward."""
    h = image_embeds.astype(jnp.float32)
    for i in range(1, 6):
        h = jnp.dot(h, params[f"w{i}"].T, precision="highest") + params[f"b{i}"]
    return h.astype(image_embeds.dtype)


if __name__ == "__main__":
    batch = 8
    hidden_size = 32  # small synthetic SiglipVisionConfig.hidden_size

    key = jax.random.PRNGKey(0)
    k_x, k_p = jax.random.split(key)
    image_embeds = jax.random.normal(k_x, (batch, hidden_size), jnp.float32)
    params = init_params(hidden_size, k_p)

    # One-time (load-time) fusion of the activation-free MLP into an affine map.
    w_row, b_fused = fuse_head_params(params)

    out = aesthetic_predictor_head(image_embeds, w_row, b_fused)
    out = jax.block_until_ready(out)

    ref = reference_forward(image_embeds, params)
    assert out.shape == (batch, 1), out.shape
    # Fused single-shot affine vs 5-step highest-precision reference: f32
    # accumulation in both, so 1e-4 holds at this size; widen for bf16 inputs
    # or very large hidden sizes.
    assert jnp.allclose(out, ref, atol=1e-4, rtol=1e-4), (out, ref)

    print("KERNEL_OK")
</pallas_src>

<mosaic_0001>
module attributes {stable_mosaic.version = 11 : i64} {
  func.func @_fused_head_kernel(%arg0: i32, %arg1: memref<8x32xf32, #tpu.memory_space<vmem>>, %arg2: memref<1x32xf32, #tpu.memory_space<vmem>>, %arg3: memref<1x1xf32, #tpu.memory_space<vmem>>, %arg4: memref<8x1xf32, #tpu.memory_space<vmem>>) attributes {dimension_semantics = [#tpu.dimension_semantics<parallel>], iteration_bounds = array<i64: 1>, scalar_prefetch = 0 : i64, scratch_operands = 0 : i64, tpu.core_type = #tpu.core_type<tc>, window_params = [{transform_indices = @transform_0, window_bounds = array<i64: 8, 32>}, {pipeline_mode = #tpu.pipeline_mode<synchronous>, transform_indices = @transform_1, window_bounds = array<i64: 1, 32>}, {pipeline_mode = #tpu.pipeline_mode<synchronous>, transform_indices = @transform_2, window_bounds = array<i64: 1, 1>}, {transform_indices = @transform_3, window_bounds = array<i64: 8, 1>}]} {
    %c0 = arith.constant 0 : index
    %c0_0 = arith.constant 0 : index
    %0 = vector.load %arg1[%c0, %c0_0] : memref<8x32xf32, #tpu.memory_space<vmem>>, vector<8x32xf32>
    %c0_1 = arith.constant 0 : index
    %c0_2 = arith.constant 0 : index
    %1 = vector.load %arg2[%c0_1, %c0_2] : memref<1x32xf32, #tpu.memory_space<vmem>>, vector<1x32xf32>
    %2 = vector.broadcast %1 : vector<1x32xf32> to vector<8x32xf32>
    %3 = arith.mulf %0, %2 : vector<8x32xf32>
    %cst = arith.constant dense<0.000000e+00> : vector<8xf32>
    %4 = vector.multi_reduction <add>, %3, %cst [1] : vector<8x32xf32> to vector<8xf32>
    %5 = vector.shape_cast %4 : vector<8xf32> to vector<8x1xf32>
    %c0_3 = arith.constant 0 : index
    %c0_4 = arith.constant 0 : index
    %6 = vector.load %arg3[%c0_3, %c0_4] : memref<1x1xf32, #tpu.memory_space<vmem>>, vector<1x1xf32>
    %7 = vector.broadcast %6 : vector<1x1xf32> to vector<8x1xf32>
    %8 = arith.addf %5, %7 : vector<8x1xf32>
    %c0_5 = arith.constant 0 : index
    %c0_6 = arith.constant 0 : index
    %9 = vector.load %arg4[%c0_5, %c0_6] : memref<8x1xf32, #tpu.memory_space<vmem>>, vector<8x1xf32>
    tpu.vector_store %arg4[%c0_5, %c0_6], %8 {strides = array<i32>} : memref<8x1xf32, #tpu.memory_space<vmem>>, vector<8x1xf32>,
    return
  }
  func.func @transform_0(%arg0: i32) -> (i32, i32) {
    %c0_i32 = arith.constant 0 : i32
    %c0_i32_0 = arith.constant 0 : i32
    return %arg0, %c0_i32 : i32, i32
  }
  func.func @transform_1(%arg0: i32) -> (i32, i32) {
    %c0_i32 = arith.constant 0 : i32
    %c0_i32_0 = arith.constant 0 : i32
    %c0_i32_1 = arith.constant 0 : i32
    return %c0_i32, %c0_i32_0 : i32, i32
  }
  func.func @transform_2(%arg0: i32) -> (i32, i32) {
    %c0_i32 = arith.constant 0 : i32
    %c0_i32_0 = arith.constant 0 : i32
    %c0_i32_1 = arith.constant 0 : i32
    return %c0_i32, %c0_i32_0 : i32, i32
  }
  func.func @transform_3(%arg0: i32) -> (i32, i32) {
    %c0_i32 = arith.constant 0 : i32
    %c0_i32_0 = arith.constant 0 : i32
    return %arg0, %c0_i32 : i32, i32
  }
}

</mosaic_0001>

<llo_original>
// kernel: tpu_custom_call.1
$region0: #{tpu_custom_call.1}
  #allocation0 [shape = 'u32[]', space=smem, size = 0x4, offset = 0x4, fixed_abs, tag = 'smem constant byte address 0x4 - core index']
  #allocation1 [shape = 'u32[144,128]{1,0:T(1,128)}', space=vmem, size = 0x12000, scoped, tag = 'internal scratch']
  #allocation2 [shape = 'f32[1,1]{1,0:T(1,128)S(1)}', space=vmem, size = 0x200, scoped, tag = 'scoped memory for tpu_custom_call.1']
  %s0 = inlined_call_operand.hbm [shape: f32[8,32], index: 0, kind: input, shape index: {}]
  %s1 = inlined_call_operand.vmem [shape: f32[1,32], index: 1, kind: input, shape index: {}]
  %s2 = inlined_call_operand.<no memory space> [shape: f32[1,1], index: 2, kind: input, shape index: {}]
  %s3 = inlined_call_operand.vmem [shape: f32[8,1], index: 3, kind: output, shape index: {}]
  %s4 = sld [smem:[#allocation0]]
  $region26: #{tpu_custom_call.1} parent=0
    _
  %s6 = ssub.s32 1, %s4
  %s7 = scalar_select 0, %s6, %s4
  %v8 = vstv %s2
  %9 = vst [vmem:[#allocation2] sm:$0x1] %v8
  $region1: #{tpu_custom_call.1} parent=0
    #allocation3 [shape = 'u8[4096]{0}', space=vmem, size = 0x1000, scoped, tag = 'input window, operand 0, single buffered']
    #allocation4 [shape = 's32[1]{0}', space=sflag, size = 0x4, scoped, tag = 'scoped memory for tpu_custom_call.1']
    %10 = vsyncpa [#allocation4], 0
    // Predicated region
    $region2: #{tpu_custom_call.1} parent=1 // pred_check
      _
    $region3: #{tpu_custom_call.1} parent=1 // pred_check_branch
      %12 = sbr.rel (0) target = $region5
    $region4: #{tpu_custom_call.1} parent=1 // pred_region
      %s14 = ssub.s32 128, 128
      %15 = vsyncadd [#allocation4], %s14
      %s17 = sshll.u32 [#allocation3], 4
      %s18 = int_to_ptr.vmem [resolvable:$true] %s17
      %20 = dma.hbm_to_vmem [thread:$0]  %s0, 128, %s18, [#allocation4]
    $region5: #{tpu_custom_call.1} parent=1 // pred_fallthru
      _
    // Predicated region
    $region6: #{tpu_custom_call.1} parent=1 // pred_check
      _
    $region7: #{tpu_custom_call.1} parent=1 // pred_check_branch
      %22 = sbr.rel (0) target = $region9
    $region8: #{tpu_custom_call.1} parent=1 // pred_region
      _
    $region9: #{tpu_custom_call.1} parent=1 // pred_fallthru
      _
    // Predicated region
    $region10: #{tpu_custom_call.1} parent=1 // pred_check
      _
    $region11: #{tpu_custom_call.1} parent=1 // pred_check_branch
      %24 = sbr.rel (0) target = $region13
    $region12: #{tpu_custom_call.1} parent=1 // pred_region
      _
    $region13: #{tpu_custom_call.1} parent=1 // pred_fallthru
      _
    // Predicated region
    $region14: #{tpu_custom_call.1} parent=1 // pred_check
      _
    $region15: #{tpu_custom_call.1} parent=1 // pred_check_branch
      %26 = sbr.rel (0) target = $region17
    $region16: #{tpu_custom_call.1} parent=1 // pred_region
      %27 = dma.done [#allocation4], 128
    $region17: #{tpu_custom_call.1} parent=1 // pred_fallthru
      _
    %v28 = vld [vmem:[#allocation3] sm:$0xff]
    %v29 = vld [vmem:[%s1] sm:$0x1]
    %v31 = vlaneseq
    %v32 = vshrl.u32 %v31, 7
    %v33 = vsub.s32 0, %v32
    %v34 = vrot.slane %v29, %v33
    %v36 = vmul.f32 %v28, %v34
    %vm37 = vcmask 261120
    %v38 = vsel %vm37, %v36, 0.0
    %39 = vadd.xlane.f32.xlu0 %v38
    %v40 = vpop.xlane.xlu0 %39
    %v41 = vld [vmem:[#allocation2] sm:$0x1]
    %v43 = vlaneseq
    %v44 = vshrl.u32 %v43, 7
    %v45 = vsub.s32 0, %v44
    %v46 = vrot.slane %v41, %v45
    %v48 = vadd.f32 %v40, %v46
    %vm49 = vcmask 7168
    %50 = vst.msk [vmem:[%s3] sm:$0xff] %vm49, %v48
    // Predicated region
    $region18: #{tpu_custom_call.1} parent=1 // pred_check
      _
    $region19: #{tpu_custom_call.1} parent=1 // pred_check_branch
      %52 = sbr.rel (0) target = $region21
    $region20: #{tpu_custom_call.1} parent=1 // pred_region
      _
    $region21: #{tpu_custom_call.1} parent=1 // pred_fallthru
      _
    // Predicated region
    $region22: #{tpu_custom_call.1} parent=1 // pred_check
      _
    $region23: #{tpu_custom_call.1} parent=1 // pred_check_branch
      %54 = sbr.rel (0) target = $region25
    $region24: #{tpu_custom_call.1} parent=1 // pred_region
      _
    $region25: #{tpu_custom_call.1} parent=1 // pred_fallthru
      _
    %55 = vsyncpa [#allocation4], 1

</llo_original>
